<compile_context>
chip_gen: v6e
topology: v6e:2x2x1
jax: 0.10.0
libtpu: 0.0.40
codegen_flags: <defaults>
</compile_context>

<pallas_src>
import math

import jax
import jax.numpy as jnp
from jax.experimental import pallas as pl
from jax.experimental.pallas import tpu as pltpu

_NEG_INF = -1e30   # finite "minus infinity": padded lanes stay NaN-free


def _round_up(x, m):
    return ((x + m - 1) // m) * m


def sfm_classifier_kernel(x_ref, w_ref, b_ref, o_ref):
    # x_ref: (1, ts, d_in)     batch-major feature tile (one batch row)
    # w_ref: (d_in, Dp)        resident weight, class dim zero-padded to 128 lanes
    # b_ref: (1, Dp)           resident bias, padded lanes = -1e30
    # o_ref: (1, ts, d_out)    UNPADDED output tile (real classes only)
    d_out = o_ref.shape[-1]

    # One large-M MXU matmul per tile; f32 accumulation.
    logits = jnp.dot(x_ref[0], w_ref[...],
                     preferred_element_type=jnp.float32) + b_ref[...]   # (ts, Dp)

    # Numerically stable log-softmax over the lane-aligned (padded) class dim.
    # Padded lanes are ~-1e30: never win the max, exp underflows to exact 0.
    m = jnp.max(logits, axis=-1, keepdims=True)                         # (ts, 1)
    lse = jnp.log(jnp.sum(jnp.exp(logits - m), axis=-1, keepdims=True)) # (ts, 1)
    shift = m + lse                                                     # fused epilogue

    # Store only the real class lanes -> unpadded HBM writes.
    o_ref[0] = (logits[:, :d_out] - shift).astype(o_ref.dtype)


def sfm_classifier_forward(feats, weight, bias, *, seq_tile=512):
    """feats : (seq_len, batch, d_in) f32
       weight: (d_in, d_out) f32   (transposed vs. torch's (d_out, d_in))
       bias  : (d_out,) f32
       returns (batch, seq_len, d_out) f32 log-probabilities."""
    S, B, d_in = feats.shape
    d_out = weight.shape[1]

    # Lane-aligned compute width (VMEM only; HBM output stays at d_out).
    d_out_p = _round_up(d_out, 128)

    # Batch-major features: single cheap HBM pass over the input so the kernel
    # needs no transpose and batch becomes a parallel grid axis (v7x 2-TC).
    x = jnp.transpose(feats, (1, 0, 2))                                  # (B, S, d_in)

    # Seq tile: multiple of 8 sublanes (f32); clamp to the sequence length.
    # 512 rows amortizes per-step overhead on v5e/v6e and still fits easily in
    # v7x's 64 MiB VMEM at these feature widths.
    ts = min(_round_up(S, 8), _round_up(seq_tile, 8))
    S_p = _round_up(S, ts)
    if S_p != S:
        x = jnp.pad(x, ((0, 0), (0, S_p - S), (0, 0)))
    n_s = S_p // ts

    w_p = jnp.pad(weight, ((0, 0), (0, d_out_p - d_out)))                # zero columns
    b_p = jnp.pad(bias, (0, d_out_p - d_out),
                  constant_values=_NEG_INF).reshape(1, d_out_p)          # -1e30 lanes

    # TODO(synk): if d_out ever grows to vocabulary scale, tile the weight over
    # the class dim with an inner 'arbitrary' grid axis + online logsumexp
    # instead of keeping the full (d_in, d_out_p) weight resident in VMEM.
    out = pl.pallas_call(
        sfm_classifier_kernel,
        out_shape=jax.ShapeDtypeStruct((B, S_p, d_out), jnp.float32),
        grid_spec=pltpu.PrefetchScalarGridSpec(
            num_scalar_prefetch=0,
            grid=(B, n_s),
            in_specs=[
                pl.BlockSpec((1, ts, d_in), lambda b, s: (b, s, 0)),     # feature tile
                pl.BlockSpec((d_in, d_out_p), lambda b, s: (0, 0)),      # resident weight
                pl.BlockSpec((1, d_out_p), lambda b, s: (0, 0)),         # resident bias
            ],
            out_specs=pl.BlockSpec((1, ts, d_out), lambda b, s: (b, s, 0)),
        ),
        compiler_params=pltpu.CompilerParams(
            dimension_semantics=("parallel", "parallel"),
            # Above the 16/32 MiB scoped defaults, under v7x's 64 MiB physical.
            vmem_limit_bytes=48 << 20),
    )(x, w_p, b_p)

    # Only the (tiny, unpadded-class) seq tail needs stripping, if any.
    if S_p != S:
        out = out[:, :S, :]
    return out


def reference_forward(feats, weight, bias):
    logits = jnp.einsum("sbi,io->sbo", feats, weight) + bias
    logp = jax.nn.log_softmax(logits, axis=-1)
    return jnp.transpose(logp, (1, 0, 2))


if __name__ == "__main__":
    # Shapes consistent with the module: seq_len=8, batch=2, d_in=32, d_out=16.
    seq_len, batch, d_in, d_out = 8, 2, 32, 16

    key = jax.random.PRNGKey(0)
    k_feats, k_w, k_b = jax.random.split(key, 3)

    feats = jax.random.normal(k_feats, (seq_len, batch, d_in), dtype=jnp.float32)

    # Deterministic init mimicking nn.Linear default: U(-1/sqrt(d_in), 1/sqrt(d_in))
    bound = 1.0 / math.sqrt(d_in)
    weight = jax.random.uniform(k_w, (d_in, d_out), jnp.float32, -bound, bound)
    bias = jax.random.uniform(k_b, (d_out,), jnp.float32, -bound, bound)

    # NOTE: dropout_p defaults to 0 / eval semantics, so Dropout is the identity;
    # tags/masks are unused in the torch forward.
    out = sfm_classifier_forward(feats, weight, bias)
    out = jax.block_until_ready(out)

    ref = reference_forward(feats, weight, bias)
    assert out.shape == (batch, seq_len, d_out)
    assert jnp.allclose(out, ref, atol=1e-5, rtol=1e-5)

    # Extra check: non-multiple-of-8 seq_len and odd batch exercise the padding path.
    feats2 = jax.random.normal(jax.random.PRNGKey(1), (13, 3, d_in), dtype=jnp.float32)
    out2 = jax.block_until_ready(sfm_classifier_forward(feats2, weight, bias))
    ref2 = reference_forward(feats2, weight, bias)
    assert out2.shape == (3, 13, d_out)
    assert jnp.allclose(out2, ref2, atol=1e-5, rtol=1e-5)

    print("KERNEL_OK")
</pallas_src>

<mosaic_0001>
module attributes {stable_mosaic.version = 11 : i64} {
  func.func @sfm_classifier_kernel(%arg0: i32, %arg1: i32, %arg2: memref<1x8x32xf32, #tpu.memory_space<vmem>>, %arg3: memref<32x128xf32, #tpu.memory_space<vmem>>, %arg4: memref<1x128xf32, #tpu.memory_space<vmem>>, %arg5: memref<1x8x16xf32, #tpu.memory_space<vmem>>) attributes {dimension_semantics = [#tpu.dimension_semantics<parallel>, #tpu.dimension_semantics<parallel>], iteration_bounds = array<i64: 2, 1>, scalar_prefetch = 0 : i64, scratch_operands = 0 : i64, tpu.core_type = #tpu.core_type<tc>, window_params = [{transform_indices = @transform_0, window_bounds = array<i64: 1, 8, 32>}, {pipeline_mode = #tpu.pipeline_mode<synchronous>, transform_indices = @transform_1, window_bounds = array<i64: 32, 128>}, {pipeline_mode = #tpu.pipeline_mode<synchronous>, transform_indices = @transform_2, window_bounds = array<i64: 1, 128>}, {transform_indices = @transform_3, window_bounds = array<i64: 1, 8, 16>}]} {
    %c0 = arith.constant 0 : index
    %c0_0 = arith.constant 0 : index
    %c0_1 = arith.constant 0 : index
    %0 = vector.load %arg2[%c0, %c0_0, %c0_1] : memref<1x8x32xf32, #tpu.memory_space<vmem>>, vector<1x8x32xf32>
    %1 = vector.shape_cast %0 : vector<1x8x32xf32> to vector<8x32xf32>
    %c0_2 = arith.constant 0 : index
    %c0_3 = arith.constant 0 : index
    %2 = vector.load %arg3[%c0_2, %c0_3] : memref<32x128xf32, #tpu.memory_space<vmem>>, vector<32x128xf32>
    %cst = arith.constant dense<0.000000e+00> : vector<8x128xf32>
    %3 = tpu.matmul %1, %2, %cst {dimension_numbers = #tpu.dot_dimension_numbers<[1], [0], [0], [1], [0, 0, 1, 1], [], []>} : vector<8x32xf32>, vector<32x128xf32>, vector<8x128xf32> -> vector<8x128xf32>
    %c0_4 = arith.constant 0 : index
    %c0_5 = arith.constant 0 : index
    %4 = vector.load %arg4[%c0_4, %c0_5] : memref<1x128xf32, #tpu.memory_space<vmem>>, vector<1x128xf32>
    %5 = vector.broadcast %4 : vector<1x128xf32> to vector<8x128xf32>
    %6 = arith.addf %3, %5 : vector<8x128xf32>
    %cst_6 = arith.constant dense<0xFF800000> : vector<8xf32>
    %7 = vector.multi_reduction <maximumf>, %6, %cst_6 [1] : vector<8x128xf32> to vector<8xf32>
    %8 = vector.shape_cast %7 : vector<8xf32> to vector<8x1xf32>
    %9 = vector.broadcast %8 : vector<8x1xf32> to vector<8x128xf32>
    %10 = arith.subf %6, %9 : vector<8x128xf32>
    %11 = math.exp %10 : vector<8x128xf32>
    %cst_7 = arith.constant dense<0.000000e+00> : vector<8xf32>
    %12 = vector.multi_reduction <add>, %11, %cst_7 [1] : vector<8x128xf32> to vector<8xf32>
    %13 = vector.shape_cast %12 : vector<8xf32> to vector<8x1xf32>
    %14 = math.log %13 : vector<8x1xf32>
    %15 = arith.addf %8, %14 : vector<8x1xf32>
    %16 = vector.extract_strided_slice %6 {offsets = [0, 0], sizes = [8, 16], strides = [1, 1]} : vector<8x128xf32> to vector<8x16xf32>
    %17 = vector.broadcast %15 : vector<8x1xf32> to vector<8x16xf32>
    %18 = arith.subf %16, %17 : vector<8x16xf32>
    %c0_8 = arith.constant 0 : index
    %c0_9 = arith.constant 0 : index
    %c0_10 = arith.constant 0 : index
    %19 = vector.load %arg5[%c0_8, %c0_9, %c0_10] : memref<1x8x16xf32, #tpu.memory_space<vmem>>, vector<1x8x16xf32>
    %20 = vector.shape_cast %19 : vector<1x8x16xf32> to vector<8x16xf32>
    %21 = vector.shape_cast %18 : vector<8x16xf32> to vector<1x8x16xf32>
    tpu.vector_store %arg5[%c0_8, %c0_9, %c0_10], %21 {strides = array<i32>} : memref<1x8x16xf32, #tpu.memory_space<vmem>>, vector<1x8x16xf32>,
    return
  }
  func.func @transform_0(%arg0: i32, %arg1: i32) -> (i32, i32, i32) {
    %c0_i32 = arith.constant 0 : i32
    %c0_i32_0 = arith.constant 0 : i32
    return %arg0, %arg1, %c0_i32 : i32, i32, i32
  }
  func.func @transform_1(%arg0: i32, %arg1: i32) -> (i32, i32) {
    %c0_i32 = arith.constant 0 : i32
    %c0_i32_0 = arith.constant 0 : i32
    %c0_i32_1 = arith.constant 0 : i32
    return %c0_i32, %c0_i32_0 : i32, i32
  }
  func.func @transform_2(%arg0: i32, %arg1: i32) -> (i32, i32) {
    %c0_i32 = arith.constant 0 : i32
    %c0_i32_0 = arith.constant 0 : i32
    %c0_i32_1 = arith.constant 0 : i32
    return %c0_i32, %c0_i32_0 : i32, i32
  }
  func.func @transform_3(%arg0: i32, %arg1: i32) -> (i32, i32, i32) {
    %c0_i32 = arith.constant 0 : i32
    %c0_i32_0 = arith.constant 0 : i32
    return %arg0, %arg1, %c0_i32 : i32, i32, i32
  }
}

</mosaic_0001>

<llo_original>
// kernel: tpu_custom_call.1
$region0: #{tpu_custom_call.1}
  #allocation0 [shape = 'u32[]', space=smem, size = 0x4, offset = 0x4, fixed_abs, tag = 'smem constant byte address 0x4 - core index']
  #allocation1 [shape = 'u32[144,128]{1,0:T(1,128)}', space=vmem, size = 0x12000, scoped, tag = 'internal scratch']
  %s0 = inlined_call_operand.hbm [shape: f32[2,8,32], index: 0, kind: input, shape index: {}]
  %s1 = inlined_call_operand.hbm [shape: f32[32,128], index: 1, kind: input, shape index: {}]
  %s2 = inlined_call_operand.vmem [shape: f32[1,128], index: 2, kind: input, shape index: {}]
  %s3 = inlined_call_operand.hbm [shape: f32[2,8,16], index: 3, kind: output, shape index: {}]
  %s4 = sld [smem:[#allocation0]]
  $region53: #{tpu_custom_call.1} parent=0
    _
  %s6 = ssub.s32 1, %s4
  %s7 = scalar_select 0, %s6, %s4
  $region1: #{tpu_custom_call.1} parent=0
    #allocation2 [shape = 'u8[8192]{0}', space=vmem, size = 0x2000, scoped, tag = 'input window, operand 0']
    #allocation3 [shape = 's32[2]{0}', space=sflag, size = 0x8, scoped, tag = 'scoped memory for tpu_custom_call.1']
    #allocation4 [shape = 's32[2]{0}', space=sflag, size = 0x8, scoped, tag = 'scoped memory for tpu_custom_call.1']
    #allocation5 [shape = 'u8[16384]{0}', space=vmem, size = 0x4000, scoped, tag = 'input window, operand 1, single buffered']
    #allocation6 [shape = 's32[1]{0}', space=sflag, size = 0x4, scoped, tag = 'scoped memory for tpu_custom_call.1']
    #allocation7 [shape = 'u8[8192]{0}', space=vmem, size = 0x2000, scoped, tag = 'output window, operand 0']
    %8 = vsyncpa [#allocation3], 0
    %s9 = scalar_lea.sflag [#allocation3], 1
    %10 = vsyncpa %s9, 0
    %11 = vsyncpa [#allocation6], 0
    %12 = vsyncpa [#allocation4], 0
    %s13 = scalar_lea.sflag [#allocation4], 1
    %14 = vsyncpa %s13, 0
    loop: start=0, step=1, limit=4
    $region2: #{tpu_custom_call.1} parent=1 // loop_pre_header
      _
    $region3: #{tpu_custom_call.1} parent=1 // loop_header
      %s16 = sphi 0, %s20
      %p17 = scmp.ge.s32.totalorder %s16, 4
      %s23 = sphi 0, %s35
      %s24 = sphi 0, %s31
      %s25 = sphi 0, %s23
      %s26 = sphi 0, %s24
      %s27 = sphi 0, %s25
      %s28 = sphi 0, %s26
      %s40 = sphi 0, %s42
      %s43 = sphi 0, %s40
      %s44 = sphi 0, %s43
      %s60 = sphi 0, %s44
      %s64 = sphi 0, %s64
      %s66 = sphi 0, %s64
      %s67 = sphi 0, %s66
      %s81 = sphi 0, %s67
      %s85 = sphi 0, %s85
      %s87 = sphi 0, %s85
      %s88 = sphi 0, %s87
      %s102 = sphi 0, %s88
      %s110 = sphi 0, %s112
      %s113 = sphi 0, %s110
      %s114 = sphi 0, %s113
      %s130 = sphi 0, %s114
    $region4: #{tpu_custom_call.1} parent=1 // loop_header_branch
      %19 = sbr.rel (%p17) target = $region8
    $region5: #{tpu_custom_call.1} parent=1 // loop_body
      %s21 = ssub.s32 %s16, 1
      %s22 = ssub.s32 %s16, 2
      %s29 = sadd.s32 1, %s24
      %p30 = scmp.ge.s32.totalorder %s29, 1
      %s31 = scalar_select %p30, 0, %s29
      %s32 = sadd.s32 1, %s23
      %s33 = scalar_select %p30, %s32, %s23
      %p34 = scmp.ge.s32.totalorder %s33, 2
      %s35 = scalar_select %p34, 0, %s33
      %s36 = ssub.s32 %s23, %s35
      %s37 = ssub.s32 %s24, %s31
      %s38 = sor.u32 %s36, %s37
      %p39 = scmp.eq.s32.totalorder %s38, 0
      %s41 = sadd.s32 %s40, 1
      %s42 = scalar_select %p39, %s40, %s41
      %p45 = pneg %p39
      %p46 = scmp.eq.s32.totalorder %s16, 1
      %p47 = por %p45, %p46
      %p48 = scmp.ne.s32.totalorder %s40, %s43
      %p49 = scmp.eq.s32.totalorder %s16, 0
      %p50 = por %p48, %p49
      %p51 = scmp.ne.s32.totalorder %s40, %s43
      %p52 = scmp.eq.s32.totalorder %s21, 1
      %p53 = por %p51, %p52
      %p54 = scmp.ne.s32.totalorder %s43, %s44
      %p55 = scmp.eq.s32.totalorder %s21, 0
      %p56 = por %p54, %p55
      %p57 = scmp.ne.s32.totalorder %s43, %s44
      %p58 = scmp.eq.s32.totalorder %s22, 1
      %p59 = por %p57, %p58
      %p61 = scmp.ne.s32.totalorder %s44, %s60
      %p62 = scmp.eq.s32.totalorder %s22, 0
      %p63 = por %p61, %p62
      %s65 = sadd.s32 %s64, 1
      %p68 = scmp.eq.s32.totalorder %s16, 1
      %p69 = scmp.ne.s32.totalorder %s64, %s66
      %p70 = scmp.eq.s32.totalorder %s16, 0
      %p71 = por %p69, %p70
      %p72 = scmp.ne.s32.totalorder %s64, %s66
      %p73 = scmp.eq.s32.totalorder %s21, 1
      %p74 = por %p72, %p73
      %p75 = scmp.ne.s32.totalorder %s66, %s67
      %p76 = scmp.eq.s32.totalorder %s21, 0
      %p77 = por %p75, %p76
      %p78 = scmp.ne.s32.totalorder %s66, %s67
      %p79 = scmp.eq.s32.totalorder %s22, 1
      %p80 = por %p78, %p79
      %p82 = scmp.ne.s32.totalorder %s67, %s81
      %p83 = scmp.eq.s32.totalorder %s22, 0
      %p84 = por %p82, %p83
      %s86 = sadd.s32 %s85, 1
      %p89 = scmp.eq.s32.totalorder %s16, 1
      %p90 = scmp.ne.s32.totalorder %s85, %s87
      %p91 = scmp.eq.s32.totalorder %s16, 0
      %p92 = por %p90, %p91
      %p93 = scmp.ne.s32.totalorder %s85, %s87
      %p94 = scmp.eq.s32.totalorder %s21, 1
      %p95 = por %p93, %p94
      %p96 = scmp.ne.s32.totalorder %s87, %s88
      %p97 = scmp.eq.s32.totalorder %s21, 0
      %p98 = por %p96, %p97
      %p99 = scmp.ne.s32.totalorder %s87, %s88
      %p100 = scmp.eq.s32.totalorder %s22, 1
      %p101 = por %p99, %p100
      %p103 = scmp.ne.s32.totalorder %s88, %s102
      %p104 = scmp.eq.s32.totalorder %s22, 0
      %p105 = por %p103, %p104
      %s106 = ssub.s32 %s23, %s35
      %s107 = ssub.s32 %s24, %s31
      %s108 = sor.u32 %s106, %s107
      %p109 = scmp.eq.s32.totalorder %s108, 0
      %s111 = sadd.s32 %s110, 1
      %s112 = scalar_select %p109, %s110, %s111
      %p115 = pneg %p109
      %p116 = scmp.eq.s32.totalorder %s16, 1
      %p117 = por %p115, %p116
      %p118 = scmp.ne.s32.totalorder %s110, %s113
      %p119 = scmp.eq.s32.totalorder %s16, 0
      %p120 = por %p118, %p119
      %p121 = scmp.ne.s32.totalorder %s110, %s113
      %p122 = scmp.eq.s32.totalorder %s21, 1
      %p123 = por %p121, %p122
      %p124 = scmp.ne.s32.totalorder %s113, %s114
      %p125 = scmp.eq.s32.totalorder %s21, 0
      %p126 = por %p124, %p125
      %p127 = scmp.ne.s32.totalorder %s113, %s114
      %p128 = scmp.eq.s32.totalorder %s22, 1
      %p129 = por %p127, %p128
      %p131 = scmp.ne.s32.totalorder %s114, %s130
      %p132 = scmp.eq.s32.totalorder %s22, 0
      %p133 = por %p131, %p132
      %p134 = scmp.le.s32.totalorder 1, %s16
      %p135 = scmp.lt.s32.totalorder %s16, 3
      %p136 = pnand %p134, %p135
      %p137 = pneg %p136
      // Predicated region
      $region9: #{tpu_custom_call.1} parent=5 // pred_check
        _
      $region10: #{tpu_custom_call.1} parent=5 // pred_check_branch
        %139 = sbr.rel (%p136) target = $region12
      $region11: #{tpu_custom_call.1} parent=5 // pred_region
        %s140 = ssub.s32 %s16, 1
        // Predicated region
        $region13: #{tpu_custom_call.1} parent=11 // pred_check
          %p141 = pneg %p77
        $region14: #{tpu_custom_call.1} parent=11 // pred_check_branch
          %143 = sbr.rel (%p141) target = $region16
        $region15: #{tpu_custom_call.1} parent=11 // pred_region
          %s145 = ssub.s32 512, 512
          %146 = vsyncadd [#allocation6], %s145
          %s147 = sshll.u32 [#allocation5], 4
          %s148 = int_to_ptr.vmem [resolvable:$true] %s147
          %153 = dma.hbm_to_vmem [thread:$0]  %s1, 512, %s148, [#allocation6], 128, 128, 8
        $region16: #{tpu_custom_call.1} parent=11 // pred_fallthru
          _
        // Predicated region
        $region17: #{tpu_custom_call.1} parent=11 // pred_check
          %p154 = pneg %p98
        $region18: #{tpu_custom_call.1} parent=11 // pred_check_branch
          %156 = sbr.rel (%p154) target = $region20
        $region19: #{tpu_custom_call.1} parent=11 // pred_region
          _
        $region20: #{tpu_custom_call.1} parent=11 // pred_fallthru
          _
      $region12: #{tpu_custom_call.1} parent=5 // pred_fallthru
        _
      %p157 = scmp.lt.s32.totalorder %s16, 2
      // Predicated region
      $region21: #{tpu_custom_call.1} parent=5 // pred_check
        %p158 = pneg %p157
      $region22: #{tpu_custom_call.1} parent=5 // pred_check_branch
        %160 = sbr.rel (%p158) target = $region24
      $region23: #{tpu_custom_call.1} parent=5 // pred_region
        // Predicated region
        $region25: #{tpu_custom_call.1} parent=23 // pred_check
          %p161 = pneg %p50
        $region26: #{tpu_custom_call.1} parent=23 // pred_check_branch
          %163 = sbr.rel (%p161) target = $region28
        $region27: #{tpu_custom_call.1} parent=23 // pred_region
          %s164 = sand.u32 %s40, 1
          %s165 = scalar_lea.sflag [#allocation3], %s164
          %s166 = sand.u32 %s40, 1
          %s167 = smul.addr %s166, 8
          %s168 = scalar_lea.vmem [#allocation2], %s167
          %s170 = ssub.s32 128, 128
          %171 = vsyncadd %s165, %s170
          %s172 = sadd.s32 %s24, %s23
          %s173 = smul.addr %s172, 128
          %s174 = scalar_lea.hbm %s0, %s173
          %s176 = sshll.u32 %s168, 4
          %s177 = int_to_ptr.vmem [resolvable:$true] %s176
          %179 = dma.hbm_to_vmem [thread:$0]  %s174, 128, %s177, %s165
        $region28: #{tpu_custom_call.1} parent=23 // pred_fallthru
          _
      $region24: #{tpu_custom_call.1} parent=5 // pred_fallthru
        _
      %p180 = scmp.le.s32.totalorder 1, %s16
      %p181 = scmp.lt.s32.totalorder %s16, 3
      %p182 = pnand %p180, %p181
      %p183 = pneg %p182
      // Predicated region
      $region29: #{tpu_custom_call.1} parent=5 // pred_check
        _
      $region30: #{tpu_custom_call.1} parent=5 // pred_check_branch
        %185 = sbr.rel (%p182) target = $region32
      $region31: #{tpu_custom_call.1} parent=5 // pred_region
        %s186 = ssub.s32 %s16, 1
        %s187 = sand.u32 %s43, 1
        %s188 = scalar_lea.sflag [#allocation3], %s187
        %s189 = sand.u32 %s43, 1
        %s190 = smul.addr %s189, 8
        %s191 = scalar_lea.vmem [#allocation2], %s190
        // Predicated region
        $region33: #{tpu_custom_call.1} parent=31 // pred_check
          %p192 = pneg %p56
        $region34: #{tpu_custom_call.1} parent=31 // pred_check_branch
          %194 = sbr.rel (%p192) target = $region36
        $region35: #{tpu_custom_call.1} parent=31 // pred_region
          %195 = dma.done %s188, 128
        $region36: #{tpu_custom_call.1} parent=31 // pred_fallthru
          _
        // Predicated region
        $region37: #{tpu_custom_call.1} parent=31 // pred_check
          %p196 = pneg %p77
        $region38: #{tpu_custom_call.1} parent=31 // pred_check_branch
          %198 = sbr.rel (%p196) target = $region40
        $region39: #{tpu_custom_call.1} parent=31 // pred_region
          %199 = dma.done [#allocation6], 512
        $region40: #{tpu_custom_call.1} parent=31 // pred_fallthru
          _
        %s200 = sand.u32 %s43, 1
        %s201 = scalar_lea.sflag [#allocation3], %s200
        %s202 = sand.u32 %s43, 1
        %s203 = smul.addr %s202, 8
        %s204 = scalar_lea.vmem [#allocation2], %s203
        %p205 = pneg %p56
        %p206 = pneg %p53
        %p207 = pneg %p77
        %p208 = pneg %p74
        %p209 = pneg %p98
        %p210 = pneg %p95
        %p211 = pneg %p126
        %p212 = pneg %p123
        %s213 = sand.u32 %s113, 1
        %s214 = scalar_lea.sflag [#allocation4], %s213
        %s215 = sand.u32 %s113, 1
        %s216 = smul.addr %s215, 8
        %s217 = scalar_lea.vmem [#allocation7], %s216
        %v218 = vld [vmem:[%s191] sm:$0xff]
        %v219 = vld [vmem:[#allocation5] sm:$0xff]
        %v220 = vld [vmem:[#allocation5 + $0x8] sm:$0xff]
        %v221 = vld [vmem:[#allocation5 + $0x10] sm:$0xff]
        %v222 = vld [vmem:[#allocation5 + $0x18] sm:$0xff]
        %v223 = vld [vmem:[%s2] sm:$0x1]
        %v225 = vlaneseq
        %v226 = vshrl.u32 %v225, 7
        %v227 = vsub.s32 0, %v226
        %v228 = vrot.slane %v223, %v227
        %vm230 = vcmask 261120
        %v232 = vsel %vm230, %v218, 0
        %234 = vmatprep.subr.mxu0 0.0
        %235 = vmatpush1.msra.mxu0 0.0
        %236 = vmatprep.subr.mxu0 0.0
        %237 = vmatpush1.msra.mxu0 0.0
        %238 = vmatprep.subr.mxu0 0.0
        %239 = vmatpush1.msra.mxu0 0.0
        %240 = vmatprep.subr.mxu0 0.0
        %241 = vmatpush1.msra.mxu0 0.0
        %242 = vmatprep.subr.mxu0 0.0
        %243 = vmatpush1.msra.mxu0 0.0
        %244 = vmatprep.subr.mxu0 0.0
        %245 = vmatpush1.msra.mxu0 0.0
        %246 = vmatprep.subr.mxu0 0.0
        %247 = vmatpush1.msra.mxu0 0.0
        %248 = vmatprep.subr.mxu0 0.0
        %249 = vmatpush1.msra.mxu0 0.0
        %250 = vmatprep.subr.mxu0 0.0
        %251 = vmatpush1.msra.mxu0 0.0
        %252 = vmatprep.subr.mxu0 0.0
        %253 = vmatpush1.msra.mxu0 0.0
        %254 = vmatprep.subr.mxu0 0.0
        %255 = vmatpush1.msra.mxu0 0.0
        %256 = vmatprep.subr.mxu0 0.0
        %257 = vmatpush1.msra.mxu0 0.0
        %258 = vmatprep.subr.mxu0 0.0
        %259 = vmatpush1.msra.mxu0 %v222
        %260 = vmatprep.subr.mxu0 0.0
        %261 = vmatpush1.msra.mxu0 %v221
        %262 = vmatprep.subr.mxu0 0.0
        %263 = vmatpush1.msra.mxu0 %v220
        %264 = vmatprep.subr.mxu0 0.0
        %265 = vmatpush1.msra.mxu0 %v219
        %266 = vmatprep.subr.mxu0 0.0
        %267 = vmatpush2.msra.mxu0 0.0
        %268 = vmatprep.subr.mxu0 0.0
        %269 = vmatpush2.msra.mxu0 0.0
        %270 = vmatprep.subr.mxu0 0.0
        %271 = vmatpush2.msra.mxu0 0.0
        %272 = vmatprep.subr.mxu0 0.0
        %273 = vmatpush2.msra.mxu0 0.0
        %274 = vmatprep.subr.mxu0 0.0
        %275 = vmatpush2.msra.mxu0 0.0
        %276 = vmatprep.subr.mxu0 0.0
        %277 = vmatpush2.msra.mxu0 0.0
        %278 = vmatprep.subr.mxu0 0.0
        %279 = vmatpush2.msra.mxu0 0.0
        %280 = vmatprep.subr.mxu0 0.0
        %281 = vmatpush2.msra.mxu0 0.0
        %282 = vmatprep.subr.mxu0 0.0
        %283 = vmatpush2.msra.mxu0 0.0
        %284 = vmatprep.subr.mxu0 0.0
        %285 = vmatpush2.msra.mxu0 0.0
        %286 = vmatprep.subr.mxu0 0.0
        %287 = vmatpush2.msra.mxu0 0.0
        %288 = vmatprep.subr.mxu0 0.0
        %289 = vmatpush2.msra.mxu0 0.0
        %290 = vmatprep.subr.mxu0 0.0
        %291 = vmatpush2.msra.mxu0 0.0
        %292 = vmatprep.subr.mxu0 0.0
        %293 = vmatpush2.msra.mxu0 0.0
        %294 = vmatprep.subr.mxu0 0.0
        %295 = vmatpush2.msra.mxu0 0.0
        %296 = vmatprep.subr.mxu0 0.0
        %297 = vmatpush2.msra.mxu0 0.0
        %298 = vmatprep.mubr.f32.mxu0 0.0
        %299 = vmatmul.mubr.f32.gmra.mxu0 %v232
        %v300 = vpop.f32.mrf.mxu0
        %v301 = vadd.f32 %v228, %v300
        %v302 = vpop.f32.mrf.mxu0
        %303 = vdwg.mxu0
        %304 = vmax.xlane.f32.xlu0 %v301
        %v305 = vpop.xlane.xlu0 %304
        %v306 = vsub.f32 %v301, %v305
        %v307 = vmul.f32 %v306, 1.442695
        %v308 = vpow.pop %v307
        %309 = vadd.xlane.f32.xlu0 %v308
        %v310 = vpop.xlane.xlu0 %309
        %v311 = vlog2.pop %v310
        %v312 = vmul.f32 %v311, 0.6931472
        %v313 = vadd.f32 %v305, %v312
        %v314 = vsub.f32 %v301, %v313
        %vm315 = vcmask 130048
        %316 = vst.msk [vmem:[%s217] sm:$0xff] %vm315, %v314
        %s317 = sand.u32 %s113, 1
        %s318 = scalar_lea.sflag [#allocation4], %s317
        %s319 = sand.u32 %s113, 1
        %s320 = smul.addr %s319, 8
        %s321 = scalar_lea.vmem [#allocation7], %s320
        // Predicated region
        $region41: #{tpu_custom_call.1} parent=31 // pred_check
          %p322 = pneg %p123
        $region42: #{tpu_custom_call.1} parent=31 // pred_check_branch
          %324 = sbr.rel (%p322) target = $region44
        $region43: #{tpu_custom_call.1} parent=31 // pred_region
          %s326 = ssub.s32 128, 128
          %327 = vsyncadd %s318, %s326
          %s328 = sadd.s32 %s26, %s25
          %s329 = smul.addr %s328, 128
          %s330 = scalar_lea.hbm %s3, %s329
          %s332 = sshll.u32 %s321, 4
          %s333 = int_to_ptr.vmem [resolvable:$true] %s332
          %335 = dma.vmem_to_hbm [thread:$0]  %s333, 128, %s330, %s318
        $region44: #{tpu_custom_call.1} parent=31 // pred_fallthru
          _
      $region32: #{tpu_custom_call.1} parent=5 // pred_fallthru
        _
      %p336 = scmp.le.s32.totalorder 2, %s16
      // Predicated region
      $region45: #{tpu_custom_call.1} parent=5 // pred_check
        %p337 = pneg %p336
      $region46: #{tpu_custom_call.1} parent=5 // pred_check_branch
        %339 = sbr.rel (%p337) target = $region48
      $region47: #{tpu_custom_call.1} parent=5 // pred_region
        %s340 = ssub.s32 %s16, 2
        // Predicated region
        $region49: #{tpu_custom_call.1} parent=47 // pred_check
          %p341 = pneg %p129
        $region50: #{tpu_custom_call.1} parent=47 // pred_check_branch
          %343 = sbr.rel (%p341) target = $region52
        $region51: #{tpu_custom_call.1} parent=47 // pred_region
          %s344 = sand.u32 %s114, 1
          %s345 = scalar_lea.sflag [#allocation4], %s344
          %s346 = sand.u32 %s114, 1
          %s347 = smul.addr %s346, 8
          %s348 = scalar_lea.vmem [#allocation7], %s347
          %349 = dma.done %s345, 128
        $region52: #{tpu_custom_call.1} parent=47 // pred_fallthru
          _
      $region48: #{tpu_custom_call.1} parent=5 // pred_fallthru
        _
    $region6: #{tpu_custom_call.1} parent=1 // loop_footer
      %s20 = sadd.s32 1, %s16
    $region7: #{tpu_custom_call.1} parent=1 // loop_footer_branch
      %15 = sbr.rel target = $region3
    $region8: #{tpu_custom_call.1} parent=1 // loop_exit
      _
    %350 = vsyncpa [#allocation3], 1
    %s351 = scalar_lea.sflag [#allocation3], 1
    %352 = vsyncpa %s351, 1
    %353 = vsyncpa [#allocation6], 1
    %354 = vsyncpa [#allocation4], 1
    %s355 = scalar_lea.sflag [#allocation4], 1
    %356 = vsyncpa %s355, 1

</llo_original>
